<compile_context>
chip_gen: v7x
topology: tpu7x:2x2x1
jax: 0.10.0
libtpu: 0.0.40
codegen_flags: <defaults>
</compile_context>

<pallas_src>
import functools

import jax
import jax.numpy as jnp
from jax.experimental import pallas as pl
from jax.experimental.pallas import tpu as pltpu

LANE = 128
_WIDTHS = (512, 256, 128)          # candidate lane-dense slab widths (widest first)
MIN_BLOCK_ELEMS = 64 * 512         # below this, a padded-copy plan beats tiny blocks
NONE_TARGET_ROWS_512 = 512         # 'none' path: ~1 MiB f32 blocks on all generations


def _cdiv(a, b):
    return -(-a // b)


# ----------------------------- device heuristics ------------------------------

@functools.lru_cache(maxsize=1)
def _device_kind():
    try:
        return jax.devices()[0].device_kind.lower()
    except Exception:
        return ""


def _is_v7():
    # v7x: 2 TensorCores per chip -> worth a genuine core split of the stream.
    return "v7" in _device_kind()


def _reduction_target_rows_512():
    # Target block rows expressed at width=512 (scaled for narrower widths so block
    # bytes stay constant).  v6e/v7x: 2 MiB f32 per operand (weighted: 3 in x 2 bufs
    # x 2 MiB + 2 MiB scratch = 14 MiB < 32 MiB scoped default).  v5e keeps 1 MiB
    # (16 MiB scoped default).
    k = _device_kind()
    return 1024 if ("v6" in k or "v7" in k) else 512


# ----------------------------- tiling plan ------------------------------------

def _largest_block_rows(rows, cap_rows):
    """Largest divisor of `rows` that is a multiple of 8 and <= cap_rows (or None)."""
    if rows % 8:
        return None
    m, limit = rows // 8, cap_rows // 8
    best = None
    i = 1
    while i * i <= m:
        if m % i == 0:
            for d in (i, m // i):
                if d <= limit and (best is None or d > best):
                    best = d
        i += 1
    return None if best is None else best * 8


def _plan(n, target_rows_512):
    """Tiling plan for a flat stream of n elements.

    Returns (width, rows, block_rows, n_blocks, needs_pad).  needs_pad=False means
    rows * width == n exactly (no host-side copies at all).
    """
    for width in _WIDTHS:
        if n % width:
            continue
        rows = n // width
        cap = max((target_rows_512 * 512) // width, 8)
        if rows <= cap:
            # Single block covering the full array dims (legal regardless of 8-alignment).
            return width, rows, rows, 1, False
        br = _largest_block_rows(rows, cap)
        if br is not None and br * width >= MIN_BLOCK_ELEMS:
            return width, rows, br, rows // br, False
    # Fallback (sizes not divisible by 128 or awkward factorizations): zero-pad.
    width = 512
    rows_raw = _cdiv(n, width)
    if rows_raw <= target_rows_512:
        return width, rows_raw, rows_raw, 1, True
    block_rows = target_rows_512
    n_blocks = _cdiv(rows_raw, block_rows)
    return width, n_blocks * block_rows, block_rows, n_blocks, True


def _to_slab(x, rows, width, needs_pad):
    """Flatten to a (rows, width) lane-dense slab in native dtype.

    When needs_pad=False this is a metadata-only reshape (no HBM traffic).
    Zero padding is exact for the reductions (|0-0| contributes nothing).
    """
    flat = x.reshape(-1)
    if needs_pad:
        extra = rows * width - flat.shape[0]
        if extra:
            flat = jnp.pad(flat, (0, extra))
    return flat.reshape(rows, width)


# ----------------------------- kernels ----------------------------------------

def _make_none_kernel(has_weight, scale):
    """reduction='none' kernel; loss_weight (`scale`) fused as a trace-time constant."""
    scale = float(scale)

    def compute(p, t, w):
        d = jnp.abs(p.astype(jnp.float32) - t.astype(jnp.float32))
        if w is not None:
            d = d * w.astype(jnp.float32)
        if scale != 1.0:
            d = d * jnp.float32(scale)
        return d

    if has_weight:
        def kernel(p_ref, t_ref, w_ref, o_ref):
            o_ref[...] = compute(p_ref[...], t_ref[...], w_ref[...]).astype(o_ref.dtype)
    else:
        def kernel(p_ref, t_ref, o_ref):
            o_ref[...] = compute(p_ref[...], t_ref[...], None).astype(o_ref.dtype)
    return kernel


def _l1_sum_kernel(p_ref, t_ref, o_ref, acc_ref):
    """'sum'/'mean', no weight: elementwise-accumulate; one cross-lane reduce at the end."""
    i = pl.program_id(1)

    @pl.when(i == 0)
    def _():
        acc_ref[...] = jnp.zeros_like(acc_ref)

    acc_ref[...] += jnp.abs(p_ref[...].astype(jnp.float32)
                            - t_ref[...].astype(jnp.float32))

    @pl.when(i == pl.num_programs(1) - 1)
    def _():
        o_ref[...] = jnp.broadcast_to(jnp.sum(acc_ref[...]), o_ref.shape)


def _l1_sum_w_kernel(p_ref, t_ref, w_ref, o_ref, acc_ref):
    """'sum'/'mean', weighted."""
    i = pl.program_id(1)

    @pl.when(i == 0)
    def _():
        acc_ref[...] = jnp.zeros_like(acc_ref)

    d = jnp.abs(p_ref[...].astype(jnp.float32) - t_ref[...].astype(jnp.float32))
    acc_ref[...] += d * w_ref[...].astype(jnp.float32)

    @pl.when(i == pl.num_programs(1) - 1)
    def _():
        o_ref[...] = jnp.broadcast_to(jnp.sum(acc_ref[...]), o_ref.shape)


# ----------------------------- wrapper -----------------------------------------

def l1_loss_pallas(pred, target, weight=None, reduction='mean', avg_factor=None,
                   scale=1.0):
    """Pallas implementation of mmcv-style weighted l1_loss (loss_weight fused via `scale`)."""
    if reduction not in ('none', 'mean', 'sum'):
        raise ValueError(f"unsupported reduction: {reduction}")
    scale = float(scale)  # loss_weight must be a Python scalar (trace-time constant)

    if target.size == 0:
        # matches `return pred.sum() * 0`
        return jnp.sum(pred) * 0.0
    assert pred.shape == target.shape, "pred/target shape mismatch"

    n = pred.size
    orig_shape = pred.shape
    out_dtype = jnp.result_type(pred.dtype, target.dtype)
    if weight is not None:
        out_dtype = jnp.result_type(out_dtype, weight.dtype)
        if weight.shape != pred.shape:
            # TODO(synk): express simple broadcast patterns via the weight BlockSpec
            # index_map instead of materializing; only the mismatched-shape case pays.
            weight = jnp.broadcast_to(weight, pred.shape)

    # ---------------- reduction='none': elementwise kernel ----------------
    if reduction == 'none':
        # NOTE: mmcv's weight_reduce_loss ignores avg_factor for 'none'.
        width, rows, block_rows, n_blocks, needs_pad = _plan(n, NONE_TARGET_ROWS_512)

        operands = [_to_slab(pred, rows, width, needs_pad),
                    _to_slab(target, rows, width, needs_pad)]
        if weight is not None:
            operands.append(_to_slab(weight, rows, width, needs_pad))
        kernel = _make_none_kernel(weight is not None, scale)

        tile = pl.BlockSpec((block_rows, width), lambda i: (i, 0))
        dim_sem = pltpu.PARALLEL
        if _is_v7() and n_blocks >= 2 and n_blocks % 2 == 0:
            dim_sem = pltpu.CORE_PARALLEL  # split the stream across both v7x TCs

        out2 = pl.pallas_call(
            kernel,
            out_shape=jax.ShapeDtypeStruct((rows, width), out_dtype),
            grid_spec=pltpu.PrefetchScalarGridSpec(
                num_scalar_prefetch=0,
                grid=(n_blocks,),
                in_specs=[tile] * len(operands),
                out_specs=tile,
            ),
            compiler_params=pltpu.CompilerParams(dimension_semantics=(dim_sem,)),
        )(*operands)

        if needs_pad:
            return out2.reshape(-1)[:n].reshape(orig_shape)
        return out2.reshape(orig_shape)  # free metadata reshape (rows*width == n)

    # ---------------- reduction='sum'/'mean': accumulating kernel ----------------
    if reduction == 'sum' and avg_factor is not None:
        raise ValueError('avg_factor can not be used with reduction="sum"')

    width, rows, block_rows, n_blocks, needs_pad = _plan(n, _reduction_target_rows_512())

    n_par = 1
    par_sem = pltpu.PARALLEL
    if _is_v7() and n_blocks >= 2 and n_blocks % 2 == 0:
        n_par = 2                       # one chunk per TensorCore on v7x
        par_sem = pltpu.CORE_PARALLEL
    n_inner = n_blocks // n_par

    operands = [_to_slab(pred, rows, width, needs_pad),
                _to_slab(target, rows, width, needs_pad)]
    kernel = _l1_sum_kernel
    if weight is not None:
        operands.append(_to_slab(weight, rows, width, needs_pad))
        kernel = _l1_sum_w_kernel

    in_tile = pl.BlockSpec((block_rows, width), lambda p, i: (p * n_inner + i, 0))
    # Each chunk owns one lane-dense (8,128) output block (unmasked store).
    out_tile = pl.BlockSpec((8, LANE), lambda p, i: (p, 0))

    partials = pl.pallas_call(
        kernel,
        out_shape=jax.ShapeDtypeStruct((n_par * 8, LANE), jnp.float32),
        grid_spec=pltpu.PrefetchScalarGridSpec(
            num_scalar_prefetch=0,
            grid=(n_par, n_inner),
            in_specs=[in_tile] * len(operands),
            out_specs=out_tile,
            scratch_shapes=[pltpu.VMEM((block_rows, width), jnp.float32)],
        ),
        compiler_params=pltpu.CompilerParams(
            dimension_semantics=(par_sem, pltpu.ARBITRARY)),
    )(*operands)

    # Block p is filled with its chunk's partial sum; pick one element per chunk.
    total = jnp.sum(partials[::8, 0])

    # Scalar reductions are returned in float32 (the accumulation dtype).
    if reduction == 'mean':
        denom = jnp.float32(n) if avg_factor is None else avg_factor
        total = total / denom
    if scale != 1.0:
        total = total * jnp.float32(scale)
    return total


class L1Loss:
    """JAX/Pallas port of easycv L1Loss (no trainable parameters)."""

    def __init__(self, reduction='mean', loss_weight=1.0):
        assert reduction in ('none', 'mean', 'sum')
        self.reduction = reduction
        self.loss_weight = float(loss_weight)

    def __call__(self, pred, target, weight=None, avg_factor=None,
                 reduction_override=None):
        assert reduction_override in (None, 'none', 'mean', 'sum')
        reduction = reduction_override if reduction_override else self.reduction
        # loss_weight is fused into the 'none' kernel / applied to the reduced scalar
        # inside l1_loss_pallas -> no extra full-array HBM pass.
        return l1_loss_pallas(pred, target, weight=weight, reduction=reduction,
                              avg_factor=avg_factor, scale=self.loss_weight)


# ----------------------------- demo / check -------------------------------------

if __name__ == "__main__":
    key = jax.random.PRNGKey(0)
    k1, k2, k3, k4, k5 = jax.random.split(key, 5)

    # NCHW-like prediction / target (e.g. dense regression maps)
    pred = jax.random.normal(k1, (2, 4, 16, 16), dtype=jnp.float32)
    target = jax.random.normal(k2, (2, 4, 16, 16), dtype=jnp.float32)
    weight = jax.random.uniform(k3, (2, 4, 16, 16), dtype=jnp.float32)

    loss_mod = L1Loss(reduction='mean', loss_weight=1.0)
    loss_half = L1Loss(reduction='none', loss_weight=0.5)

    out_mean = loss_mod(pred, target)                                    # mean, no weight
    out_avg = loss_mod(pred, target, weight=weight, avg_factor=123.0)    # weighted / avg_factor
    out_sum = loss_mod(pred, target, reduction_override='sum')           # sum
    out_none = loss_mod(pred, target, weight=weight,
                        reduction_override='none')                       # weighted elementwise
    out_none_scaled = loss_half(pred, target)                            # loss_weight fused

    # bf16 elementwise path (narrow-dtype load + store)
    pred_bf = pred.astype(jnp.bfloat16)
    target_bf = target.astype(jnp.bfloat16)
    out_none_bf = loss_mod(pred_bf, target_bf, reduction_override='none')

    # size divisible by 128 but not 512 (no-pad path with a narrower slab)
    p128 = jax.random.normal(k4, (3, 128), dtype=jnp.float32)
    t128 = jax.random.normal(k5, (3, 128), dtype=jnp.float32)
    out_128_sum = loss_mod(p128, t128, reduction_override='sum')

    # ragged size (pad-fallback path) for both reductions
    p_rag = pred.reshape(-1)[:315].reshape(5, 63)
    t_rag = target.reshape(-1)[:315].reshape(5, 63)
    out_rag_mean = loss_mod(p_rag, t_rag)
    out_rag_none = loss_mod(p_rag, t_rag, reduction_override='none')

    # larger input: exercises multi-block grid (+ core-parallel split on v7x)
    big_p = jax.random.normal(k4, (16, 16, 64, 64), dtype=jnp.float32)
    big_t = jax.random.normal(k5, (16, 16, 64, 64), dtype=jnp.float32)
    out_big_mean = loss_mod(big_p, big_t)

    jax.block_until_ready((out_mean, out_avg, out_sum, out_none, out_none_scaled,
                           out_none_bf, out_128_sum, out_rag_mean, out_rag_none,
                           out_big_mean))

    # Reference checks in plain JAX
    ref_abs = jnp.abs(pred - target)
    assert jnp.allclose(out_mean, ref_abs.mean(), rtol=1e-5, atol=1e-5)
    assert jnp.allclose(out_avg, (ref_abs * weight).sum() / 123.0, rtol=1e-5, atol=1e-4)
    assert jnp.allclose(out_sum, ref_abs.sum(), rtol=1e-5, atol=1e-4)
    assert jnp.allclose(out_none, ref_abs * weight, rtol=1e-5, atol=1e-5)
    assert jnp.allclose(out_none_scaled, 0.5 * ref_abs, rtol=1e-5, atol=1e-5)

    assert out_none_bf.dtype == jnp.bfloat16
    ref_bf = jnp.abs(pred_bf.astype(jnp.float32) - target_bf.astype(jnp.float32))
    assert jnp.allclose(out_none_bf.astype(jnp.float32), ref_bf, rtol=1e-2, atol=1e-2)

    assert jnp.allclose(out_128_sum, jnp.abs(p128 - t128).sum(), rtol=1e-5, atol=1e-4)
    assert jnp.allclose(out_rag_mean, jnp.abs(p_rag - t_rag).mean(), rtol=1e-5, atol=1e-5)
    assert out_rag_none.shape == (5, 63)
    assert jnp.allclose(out_rag_none, jnp.abs(p_rag - t_rag), rtol=1e-5, atol=1e-5)
    assert jnp.allclose(out_big_mean, jnp.abs(big_p - big_t).mean(), rtol=1e-4, atol=1e-5)

    print("KERNEL_OK")
</pallas_src>

<mosaic_0001>
module attributes {stable_mosaic.version = 11 : i64} {
  func.func @_l1_sum_kernel(%arg0: i32, %arg1: i32, %arg2: memref<4x512xf32, #tpu.memory_space<vmem>>, %arg3: memref<4x512xf32, #tpu.memory_space<vmem>>, %arg4: memref<8x128xf32, #tpu.memory_space<vmem>>, %arg5: memref<4x512xf32, #tpu.memory_space<vmem>>) attributes {dimension_semantics = [#tpu.dimension_semantics<parallel>, #tpu.dimension_semantics<arbitrary>], iteration_bounds = array<i64: 1, 1>, scalar_prefetch = 0 : i64, scratch_operands = 1 : i64, tpu.core_type = #tpu.core_type<tc>, window_params = [{transform_indices = @transform_0, window_bounds = array<i64: 4, 512>}, {transform_indices = @transform_1, window_bounds = array<i64: 4, 512>}, {transform_indices = @transform_2, window_bounds = array<i64: 8, 128>}]} {
    %c0_i32 = arith.constant 0 : i32
    %0 = arith.cmpi eq, %arg1, %c0_i32 : i32
    %1 = arith.extui %0 : i1 to i32
    %c0_i32_0 = arith.constant 0 : i32
    %2 = arith.cmpi ne, %1, %c0_i32_0 : i32
    scf.if %2 {
      %cst = arith.constant 0.000000e+00 : f32
      %13 = vector.broadcast %cst : f32 to vector<4x512xf32>
      %c0_10 = arith.constant 0 : index
      %c0_11 = arith.constant 0 : index
      %14 = vector.load %arg5[%c0_10, %c0_11] : memref<4x512xf32, #tpu.memory_space<vmem>>, vector<4x512xf32>
      tpu.vector_store %arg5[%c0_10, %c0_11], %13 {strides = array<i32>} : memref<4x512xf32, #tpu.memory_space<vmem>>, vector<4x512xf32>,
    } else {
    }
    %c0 = arith.constant 0 : index
    %c0_1 = arith.constant 0 : index
    %3 = vector.load %arg5[%c0, %c0_1] : memref<4x512xf32, #tpu.memory_space<vmem>>, vector<4x512xf32>
    %c0_2 = arith.constant 0 : index
    %c0_3 = arith.constant 0 : index
    %4 = vector.load %arg2[%c0_2, %c0_3] : memref<4x512xf32, #tpu.memory_space<vmem>>, vector<4x512xf32>
    %c0_4 = arith.constant 0 : index
    %c0_5 = arith.constant 0 : index
    %5 = vector.load %arg3[%c0_4, %c0_5] : memref<4x512xf32, #tpu.memory_space<vmem>>, vector<4x512xf32>
    %6 = arith.subf %4, %5 : vector<4x512xf32>
    %7 = math.absf %6 : vector<4x512xf32>
    %8 = arith.addf %3, %7 : vector<4x512xf32>
    %c0_6 = arith.constant 0 : index
    %c0_7 = arith.constant 0 : index
    %9 = vector.load %arg5[%c0_6, %c0_7] : memref<4x512xf32, #tpu.memory_space<vmem>>, vector<4x512xf32>
    tpu.vector_store %arg5[%c0_6, %c0_7], %8 {strides = array<i32>} : memref<4x512xf32, #tpu.memory_space<vmem>>, vector<4x512xf32>,
    %c0_i32_8 = arith.constant 0 : i32
    %10 = arith.cmpi eq, %arg1, %c0_i32_8 : i32
    %11 = arith.extui %10 : i1 to i32
    %c0_i32_9 = arith.constant 0 : i32
    %12 = arith.cmpi ne, %11, %c0_i32_9 : i32
    scf.if %12 {
      %c0_10 = arith.constant 0 : index
      %c0_11 = arith.constant 0 : index
      %13 = vector.load %arg5[%c0_10, %c0_11] : memref<4x512xf32, #tpu.memory_space<vmem>>, vector<4x512xf32>
      %14 = vector.shape_cast %13 : vector<4x512xf32> to vector<1x4x512xf32>
      %cst = arith.constant dense<0.000000e+00> : vector<1xf32>
      %15 = vector.multi_reduction <add>, %14, %cst [1, 2] : vector<1x4x512xf32> to vector<1xf32>
      %16 = vector.shape_cast %15 : vector<1xf32> to vector<1x1x1xf32>
      %17 = vector.extract %16[0, 0, 0] : f32 from vector<1x1x1xf32>
      %18 = vector.broadcast %17 : f32 to vector<8x128xf32>
      %c0_12 = arith.constant 0 : index
      %c0_13 = arith.constant 0 : index
      %19 = vector.load %arg4[%c0_12, %c0_13] : memref<8x128xf32, #tpu.memory_space<vmem>>, vector<8x128xf32>
      tpu.vector_store %arg4[%c0_12, %c0_13], %18 {strides = array<i32>} : memref<8x128xf32, #tpu.memory_space<vmem>>, vector<8x128xf32>,
    } else {
    }
    return
  }
  func.func @transform_0(%arg0: i32, %arg1: i32) -> (i32, i32) {
    %c1_i32 = arith.constant 1 : i32
    %0 = arith.muli %arg0, %c1_i32 : i32
    %1 = arith.addi %0, %arg1 : i32
    %c0_i32 = arith.constant 0 : i32
    %c0_i32_0 = arith.constant 0 : i32
    return %1, %c0_i32 : i32, i32
  }
  func.func @transform_1(%arg0: i32, %arg1: i32) -> (i32, i32) {
    %c1_i32 = arith.constant 1 : i32
    %0 = arith.muli %arg0, %c1_i32 : i32
    %1 = arith.addi %0, %arg1 : i32
    %c0_i32 = arith.constant 0 : i32
    %c0_i32_0 = arith.constant 0 : i32
    return %1, %c0_i32 : i32, i32
  }
  func.func @transform_2(%arg0: i32, %arg1: i32) -> (i32, i32) {
    %c0_i32 = arith.constant 0 : i32
    %c0_i32_0 = arith.constant 0 : i32
    return %arg0, %c0_i32 : i32, i32
  }
}

</mosaic_0001>

<llo_original>
// kernel: tpu_custom_call.1
$region0: #{tpu_custom_call.1}
  #allocation0 [shape = 'u32[]', space=smem, size = 0x4, offset = 0x4, fixed_abs, tag = 'smem constant byte address 0x4 - core index']
  #allocation1 [shape = 'u32[144,128]{1,0:T(1,128)}', space=vmem, size = 0x12000, scoped, tag = 'internal scratch']
  #allocation2 [shape = 'f32[4,512]{1,0:T(4,128)}', space=vmem, size = 0x2000, scoped, tag = 'scratch operand']
  %s0 = inlined_call_operand.hbm [shape: f32[4,512], index: 0, kind: input, shape index: {}]
  %s1 = inlined_call_operand.hbm [shape: f32[4,512], index: 1, kind: input, shape index: {}]
  %s2 = inlined_call_operand.hbm [shape: f32[8,128], index: 2, kind: output, shape index: {}]
  %s3 = sld [smem:[#allocation0]]
  $region34: #{tpu_custom_call.1} parent=0
    _
  %s5 = ssub.s32 1, %s3
  %s6 = scalar_select 0, %s5, %s3
  $region1: #{tpu_custom_call.1} parent=0
    #allocation3 [shape = 'u8[8192]{0}', space=vmem, size = 0x2000, scoped, tag = 'input window, operand 0, single buffered']
    #allocation4 [shape = 's32[1]{0}', space=sflag, size = 0x4, scoped, tag = 'scoped memory for tpu_custom_call.1']
    #allocation5 [shape = 's32[1]{0}', space=sflag, size = 0x4, scoped, tag = 'scoped memory for tpu_custom_call.1']
    #allocation6 [shape = 'u8[8192]{0}', space=vmem, size = 0x2000, scoped, tag = 'input window, operand 1, single buffered']
    #allocation7 [shape = 's32[1]{0}', space=sflag, size = 0x4, scoped, tag = 'scoped memory for tpu_custom_call.1']
    #allocation8 [shape = 'u8[4096]{0}', space=vmem, size = 0x1000, scoped, tag = 'output window, operand 0, single buffered']
    %7 = vsyncpa [#allocation4], 0
    %8 = vsyncpa [#allocation7], 0
    %9 = vsyncpa [#allocation5], 0
    // Predicated region
    $region2: #{tpu_custom_call.1} parent=1 // pred_check
      _
    $region3: #{tpu_custom_call.1} parent=1 // pred_check_branch
      %11 = sbr.rel (0) target = $region5
    $region4: #{tpu_custom_call.1} parent=1 // pred_region
      %s12 = sadd.s32 0, 0
      %s14 = ssub.s32 256, 256
      %15 = vsyncadd [#allocation4], %s14
      %s16 = smul.addr %s12, 4
      %s17 = smul.addr %s16, 64
      %s18 = scalar_lea.hbm %s0, %s17
      %s20 = sshll.u32 [#allocation3], 4
      %s21 = int_to_ptr.vmem [resolvable:$true] %s20
      %23 = dma.hbm_to_vmem [thread:$0]  %s18, 256, %s21, [#allocation4]
    $region5: #{tpu_custom_call.1} parent=1 // pred_fallthru
      _
    // Predicated region
    $region6: #{tpu_custom_call.1} parent=1 // pred_check
      _
    $region7: #{tpu_custom_call.1} parent=1 // pred_check_branch
      %25 = sbr.rel (0) target = $region9
    $region8: #{tpu_custom_call.1} parent=1 // pred_region
      %s26 = sadd.s32 0, 0
      %s28 = ssub.s32 256, 256
      %29 = vsyncadd [#allocation7], %s28
      %s30 = smul.addr %s26, 4
      %s31 = smul.addr %s30, 64
      %s32 = scalar_lea.hbm %s1, %s31
      %s34 = sshll.u32 [#allocation6], 4
      %s35 = int_to_ptr.vmem [resolvable:$true] %s34
      %37 = dma.hbm_to_vmem [thread:$0]  %s32, 256, %s35, [#allocation7]
    $region9: #{tpu_custom_call.1} parent=1 // pred_fallthru
      _
    // Predicated region
    $region10: #{tpu_custom_call.1} parent=1 // pred_check
      _
    $region11: #{tpu_custom_call.1} parent=1 // pred_check_branch
      %39 = sbr.rel (0) target = $region13
    $region12: #{tpu_custom_call.1} parent=1 // pred_region
      %40 = dma.done [#allocation4], 256
    $region13: #{tpu_custom_call.1} parent=1 // pred_fallthru
      _
    // Predicated region
    $region14: #{tpu_custom_call.1} parent=1 // pred_check
      _
    $region15: #{tpu_custom_call.1} parent=1 // pred_check_branch
      %42 = sbr.rel (0) target = $region17
    $region16: #{tpu_custom_call.1} parent=1 // pred_region
      %43 = dma.done [#allocation7], 256
    $region17: #{tpu_custom_call.1} parent=1 // pred_fallthru
      _
    %s44 = sadd.s32 0, 0
    %s45 = sadd.s32 0, 0
    %p46 = scmp.eq.s32.totalorder 0, 0
    // Predicated region
    $region18: #{tpu_custom_call.1} parent=1 // pred_check
      %p47 = pneg %p46
    $region19: #{tpu_custom_call.1} parent=1 // pred_check_branch
      %49 = sbr.rel (%p47) target = $region21
    $region20: #{tpu_custom_call.1} parent=1 // pred_region
      %50 = vst [vmem:[#allocation2] sm:$0xff] 0.0
      %51 = vst [vmem:[#allocation2 + $0x8] sm:$0xff] 0.0
    $region21: #{tpu_custom_call.1} parent=1 // pred_fallthru
      _
    %v52 = vld [vmem:[#allocation2] sm:$0xff]
    %v53 = vld [vmem:[#allocation2 + $0x8] sm:$0xff]
    %v54 = vld [vmem:[#allocation3] sm:$0xff]
    %v55 = vld [vmem:[#allocation3 + $0x8] sm:$0xff]
    %v56 = vld [vmem:[#allocation6] sm:$0xff]
    %v57 = vld [vmem:[#allocation6 + $0x8] sm:$0xff]
    %v58 = vsub.f32 %v54, %v56
    %v59 = vsub.f32 %v55, %v57
    %v60 = vand.u32 2147483647, %v58
    %v61 = vand.u32 2147483647, %v59
    %v62 = vadd.f32 %v52, %v60
    %v63 = vadd.f32 %v53, %v61
    %64 = vst [vmem:[#allocation2] sm:$0xff] %v62
    %65 = vst [vmem:[#allocation2 + $0x8] sm:$0xff] %v63
    // Predicated region
    $region22: #{tpu_custom_call.1} parent=1 // pred_check
      %p66 = pneg %p46
    $region23: #{tpu_custom_call.1} parent=1 // pred_check_branch
      %68 = sbr.rel (%p66) target = $region25
    $region24: #{tpu_custom_call.1} parent=1 // pred_region
      %v69 = vld [vmem:[#allocation2] sm:$0xff]
      %v70 = vld [vmem:[#allocation2 + $0x8] sm:$0xff]
      %v73 = vcombine.high %v69, %v69
      %v74 = vcombine.high %v70, %v70
      %vm77 = vcmask 1043456
      %v78 = vsel %vm77, %v69, 0.0
      %v79 = vsel %vm77, %v73, 0.0
      %v80 = vadd.f32 %v78, %v79
      %v81 = vsel %vm77, %v70, 0.0
      %v82 = vadd.f32 %v80, %v81
      %v83 = vsel %vm77, %v74, 0.0
      %v84 = vadd.f32 %v82, %v83
      %85 = vadd.xlane.f32.xlu0 %v84
      %v86 = vpop.xlane.xlu0 %85
      %v87 = vrot.slane %v86, 4
      %v88 = vadd.f32 %v86, %v87
      %v89 = vrot.slane %v88, 2
      %v90 = vadd.f32 %v88, %v89
      %v91 = vrot.slane %v90, 1
      %v92 = vadd.f32 %v90, %v91
      %s93 = vtos %v92
      %v94 = vstv %s93
      %95 = vst [vmem:[#allocation8] sm:$0xff] %v94
    $region25: #{tpu_custom_call.1} parent=1 // pred_fallthru
      _
    // Predicated region
    $region26: #{tpu_custom_call.1} parent=1 // pred_check
      _
    $region27: #{tpu_custom_call.1} parent=1 // pred_check_branch
      %97 = sbr.rel (0) target = $region29
    $region28: #{tpu_custom_call.1} parent=1 // pred_region
      %s99 = ssub.s32 128, 128
      %100 = vsyncadd [#allocation5], %s99
      %s102 = sshll.u32 [#allocation8], 4
      %s103 = int_to_ptr.vmem [resolvable:$true] %s102
      %105 = dma.vmem_to_hbm [thread:$0]  %s103, 128, %s2, [#allocation5]
    $region29: #{tpu_custom_call.1} parent=1 // pred_fallthru
      _
    // Predicated region
    $region30: #{tpu_custom_call.1} parent=1 // pred_check
      _
    $region31: #{tpu_custom_call.1} parent=1 // pred_check_branch
      %107 = sbr.rel (0) target = $region33
    $region32: #{tpu_custom_call.1} parent=1 // pred_region
      %108 = dma.done [#allocation5], 128
    $region33: #{tpu_custom_call.1} parent=1 // pred_fallthru
      _
    %109 = vsyncpa [#allocation4], 1
    %110 = vsyncpa [#allocation7], 1
    %111 = vsyncpa [#allocation5], 1

</llo_original>
